<compile_context>
chip_gen: v6e
topology: v6e:2x2x1
jax: 0.10.0
libtpu: 0.0.40
codegen_flags: <defaults>
</compile_context>

<pallas_src>
import functools

import jax
import jax.numpy as jnp
from jax.experimental import pallas as pl
from jax.experimental.pallas import tpu as pltpu


def _round_up(x, m):
    return ((x + m - 1) // m) * m


def _policy_head_kernel(x_ref, w_ref, b_ref, act_ref, alp_ref):
    """Fused: logits -> (greedy action, log-prob of that action)."""
    # In-kernel bf16 cast of the state tile (MXU operands bf16, f32 accum).
    x = x_ref[...].astype(jnp.bfloat16)
    logits = jnp.dot(x, w_ref[...], preferred_element_type=jnp.float32) + b_ref[...]

    # Numerically-stable logsumexp over the (128-padded) action axis.
    m = jnp.max(logits, axis=-1, keepdims=True)
    lse = jnp.log(jnp.sum(jnp.exp(logits - m), axis=-1, keepdims=True))

    # Greedy action: first index achieving the row max.
    a_pad = logits.shape[-1]
    col = jax.lax.broadcasted_iota(jnp.int32, logits.shape, dimension=1)
    action = jnp.min(jnp.where(logits == m, col, jnp.int32(a_pad)),
                     axis=-1, keepdims=True)
    act_ref[...] = action.astype(jnp.int32)

    # log-prob of the argmax action: max_logit - logsumexp = -lse (exact).
    alp_ref[...] = (-lse).astype(alp_ref.dtype)


def _policy_head_kernel_lp(x_ref, w_ref, b_ref, act_ref, alp_ref, lp_ref):
    """Same as above, additionally writing full log-probs (bf16)."""
    x = x_ref[...].astype(jnp.bfloat16)
    logits = jnp.dot(x, w_ref[...], preferred_element_type=jnp.float32) + b_ref[...]

    m = jnp.max(logits, axis=-1, keepdims=True)
    lse = jnp.log(jnp.sum(jnp.exp(logits - m), axis=-1, keepdims=True))

    a_pad = logits.shape[-1]
    col = jax.lax.broadcasted_iota(jnp.int32, logits.shape, dimension=1)
    action = jnp.min(jnp.where(logits == m, col, jnp.int32(a_pad)),
                     axis=-1, keepdims=True)
    act_ref[...] = action.astype(jnp.int32)
    alp_ref[...] = (-lse).astype(alp_ref.dtype)

    # Full log-softmax, stored lane-dense as bf16 (halves HBM writeback).
    lp_ref[...] = (logits - (m + lse)).astype(lp_ref.dtype)


def prepare_policy_params(weight, bias, *, lane_multiple=128):
    """Pad the action axis once and cast for the MXU (call at init, not per step)."""
    D, A = weight.shape
    A_pad = _round_up(max(A, 1), lane_multiple)
    w = jnp.asarray(weight, jnp.float32)
    b = jnp.asarray(bias, jnp.float32).reshape(1, A)
    if A_pad != A:
        w = jnp.pad(w, ((0, 0), (0, A_pad - A)))
        # NOTE: bias MUST stay f32.  -1e30 on padded action columns keeps them
        # out of the argmax and makes exp() underflow to 0; cast to bf16 it
        # would become -inf and produce NaNs in (logits - shift).
        b = jnp.pad(b, ((0, 0), (0, A_pad - A)), constant_values=-1e30)
    return w.astype(jnp.bfloat16), b


@functools.partial(jax.jit,
                   static_argnames=("num_actions", "need_log_probs", "tb_max"))
def backward_policy_forward(state, w_padded, b_padded, *, num_actions,
                            need_log_probs=False, tb_max=512):
    """Fused policy head on pre-padded params.

    Returns (action[B] i32, logp[B] f32) or, if need_log_probs,
            (action[B] i32, logp[B] f32, log_probs[B, A] bf16).
    """
    B, D = state.shape
    D2, A_pad = w_padded.shape
    assert D == D2 and A_pad % 128 == 0
    assert b_padded.shape == (1, A_pad) and b_padded.dtype == jnp.float32
    A = num_actions

    # Batch tiling: TB multiple of 8; ensure >=2 tiles when the batch is big
    # enough so the "parallel" axis can split across v7x's two TensorCores.
    B8 = _round_up(B, 8)
    TB = min(tb_max, B8)
    if B8 >= 512 and B8 // TB < 2:
        TB = _round_up((B8 + 1) // 2, 8)
    B_pad = _round_up(B8, TB)

    x = state
    if B_pad != B:
        x = jnp.zeros((B_pad, D), state.dtype).at[:B].set(state)

    # VMEM budget derived from tile sizes (double-buffered pipelined operands,
    # resident weight/bias, f32 logits/exp temporaries).  Floor at the known-
    # good 32 MiB, cap at 48 MiB to stay safe on v7x (64 MiB physical VMEM).
    itemsize = jnp.dtype(x.dtype).itemsize
    est = (2 * TB * D * itemsize            # state tile (pipelined)
           + 2 * D * A_pad * 2              # bf16 weight (resident, 2 bufs)
           + 2 * 8 * A_pad * 4              # f32 bias
           + 2 * TB * 128 * 8               # (TB,1) action + logp outputs
           + 6 * TB * A_pad * 4)            # f32 logits/exp/iota temporaries
    if need_log_probs:
        est += 2 * TB * A_pad * 2           # bf16 log_probs output block
    vmem_limit = max(32 << 20, min(_round_up(est, 1 << 20), 48 << 20))

    out_shape = [jax.ShapeDtypeStruct((B_pad, 1), jnp.int32),
                 jax.ShapeDtypeStruct((B_pad, 1), jnp.float32)]
    out_specs = [pl.BlockSpec((TB, 1), lambda i: (i, 0)),
                 pl.BlockSpec((TB, 1), lambda i: (i, 0))]
    kernel = _policy_head_kernel
    if need_log_probs:
        out_shape.append(jax.ShapeDtypeStruct((B_pad, A_pad), jnp.bfloat16))
        out_specs.append(pl.BlockSpec((TB, A_pad), lambda i: (i, 0)))
        kernel = _policy_head_kernel_lp

    outs = pl.pallas_call(
        kernel,
        out_shape=tuple(out_shape),
        grid=(B_pad // TB,),
        in_specs=[
            pl.BlockSpec((TB, D), lambda i: (i, 0)),     # state tile (pipelined)
            pl.BlockSpec((D, A_pad), lambda i: (0, 0)),  # bf16 weight: VMEM-resident
            pl.BlockSpec((1, A_pad), lambda i: (0, 0)),  # f32 bias:    VMEM-resident
        ],
        out_specs=tuple(out_specs),
        compiler_params=pltpu.CompilerParams(
            dimension_semantics=("parallel",),           # shard batch tiles
            vmem_limit_bytes=vmem_limit,
        ),
    )(x, w_padded, b_padded)

    action = outs[0][:B, 0]
    logp = outs[1][:B, 0]
    if need_log_probs:
        return action, logp, outs[2][:B, :A]
    return action, logp


class BackwardPolicyPallas:
    """Concrete backward policy honoring the abstract class's contract."""

    def __init__(self, in_features, num_actions, uses_representation=False):
        self.uses_representation = uses_representation
        self.num_actions = num_actions
        # Deterministic synthetic parameter init (no checkpoint loading).
        kw, kb = jax.random.split(jax.random.PRNGKey(42))
        scale = 1.0 / jnp.sqrt(jnp.float32(in_features))
        self.weight = (jax.random.normal(kw, (in_features, num_actions),
                                         jnp.float32) * scale)
        self.bias = (jax.random.normal(kb, (num_actions,), jnp.float32) * scale)
        # Pad + cast ONCE here (not per call): bf16 MXU weight, f32 bias.
        self.w_padded, self.b_padded = prepare_policy_params(self.weight, self.bias)

    def __call__(self, state, representation=None):
        # Reproduce the base-class assertions exactly.
        if self.uses_representation:
            assert representation is not None, \
                'Policy requires a state representation'
        else:
            assert representation is None, \
                'Policy does not use a state representation'
        # Default path: no full log_probs writeback (caller only needs these).
        action, logp = backward_policy_forward(
            state, self.w_padded, self.b_padded,
            num_actions=self.num_actions, need_log_probs=False)
        return action, logp


if __name__ == "__main__":
    B, D, A = 8, 32, 16   # small shapes: batch=8, state dim=32, 16 actions
    key = jax.random.PRNGKey(0)
    state = jax.random.normal(key, (B, D), jnp.float32)

    policy = BackwardPolicyPallas(in_features=D, num_actions=A,
                                  uses_representation=False)
    action, logp = policy(state, representation=None)
    jax.block_until_ready((action, logp))
    assert action.shape == (B,) and logp.shape == (B,)
    assert action.dtype == jnp.int32
    assert bool(jnp.all(action >= 0)) and bool(jnp.all(action < A))

    # Pure-JAX f32 reference (loose tolerance: MXU operands are bf16).
    ref_lp = jax.nn.log_softmax(state @ policy.weight + policy.bias, axis=-1)
    assert jnp.allclose(logp, jnp.max(ref_lp, axis=-1), atol=5e-2)
    assert jnp.allclose(logp, ref_lp[jnp.arange(B), action], atol=5e-2)

    # Optional full log_probs path (bf16 writeback).
    act2, logp2, log_probs = backward_policy_forward(
        state, policy.w_padded, policy.b_padded, num_actions=A,
        need_log_probs=True)
    jax.block_until_ready((act2, logp2, log_probs))
    assert log_probs.shape == (B, A) and log_probs.dtype == jnp.bfloat16
    lp_f32 = log_probs.astype(jnp.float32)
    assert jnp.allclose(jnp.sum(jnp.exp(lp_f32), axis=-1), 1.0, atol=3e-2)
    assert jnp.allclose(logp2, jnp.max(lp_f32, axis=-1), atol=3e-2)
    assert jnp.allclose(logp2, logp, atol=1e-5)
    assert bool(jnp.all(act2 >= 0)) and bool(jnp.all(act2 < A))

    # Exercise multi-tile grid + batch/action padding path (grid = 3 steps).
    Bbig = 40
    state_big = jax.random.normal(jax.random.PRNGKey(1), (Bbig, D), jnp.float32)
    act_b, logp_b = backward_policy_forward(
        state_big, policy.w_padded, policy.b_padded, num_actions=A, tb_max=16)
    jax.block_until_ready((act_b, logp_b))
    assert act_b.shape == (Bbig,) and logp_b.shape == (Bbig,)
    assert bool(jnp.all(act_b >= 0)) and bool(jnp.all(act_b < A))
    ref_lp_b = jax.nn.log_softmax(state_big @ policy.weight + policy.bias, axis=-1)
    assert jnp.allclose(logp_b, jnp.max(ref_lp_b, axis=-1), atol=5e-2)

    print("KERNEL_OK")
</pallas_src>

<mosaic_0001>
module attributes {stable_mosaic.version = 11 : i64} {
  func.func @_policy_head_kernel(%arg0: i32, %arg1: memref<8x32xf32, #tpu.memory_space<vmem>>, %arg2: memref<32x128xbf16, #tpu.memory_space<vmem>>, %arg3: memref<1x128xf32, #tpu.memory_space<vmem>>, %arg4: memref<8x1xi32, #tpu.memory_space<vmem>>, %arg5: memref<8x1xf32, #tpu.memory_space<vmem>>) attributes {dimension_semantics = [#tpu.dimension_semantics<parallel>], iteration_bounds = array<i64: 1>, scalar_prefetch = 0 : i64, scratch_operands = 0 : i64, tpu.core_type = #tpu.core_type<tc>, window_params = [{transform_indices = @transform_0, window_bounds = array<i64: 8, 32>}, {pipeline_mode = #tpu.pipeline_mode<synchronous>, transform_indices = @transform_1, window_bounds = array<i64: 32, 128>}, {pipeline_mode = #tpu.pipeline_mode<synchronous>, transform_indices = @transform_2, window_bounds = array<i64: 1, 128>}, {transform_indices = @transform_3, window_bounds = array<i64: 8, 1>}, {transform_indices = @transform_4, window_bounds = array<i64: 8, 1>}]} {
    %c0 = arith.constant 0 : index
    %c0_0 = arith.constant 0 : index
    %0 = vector.load %arg1[%c0, %c0_0] : memref<8x32xf32, #tpu.memory_space<vmem>>, vector<8x32xf32>
    %1 = arith.truncf %0 : vector<8x32xf32> to vector<8x32xbf16>
    %c0_1 = arith.constant 0 : index
    %c0_2 = arith.constant 0 : index
    %2 = vector.load %arg2[%c0_1, %c0_2] : memref<32x128xbf16, #tpu.memory_space<vmem>>, vector<32x128xbf16>
    %cst = arith.constant dense<0.000000e+00> : vector<8x128xf32>
    %3 = tpu.matmul %1, %2, %cst {dimension_numbers = #tpu.dot_dimension_numbers<[1], [0], [0], [1], [0, 0, 1, 1], [], []>} : vector<8x32xbf16>, vector<32x128xbf16>, vector<8x128xf32> -> vector<8x128xf32>
    %c0_3 = arith.constant 0 : index
    %c0_4 = arith.constant 0 : index
    %4 = vector.load %arg3[%c0_3, %c0_4] : memref<1x128xf32, #tpu.memory_space<vmem>>, vector<1x128xf32>
    %5 = vector.broadcast %4 : vector<1x128xf32> to vector<8x128xf32>
    %6 = arith.addf %3, %5 : vector<8x128xf32>
    %cst_5 = arith.constant dense<0xFF800000> : vector<8xf32>
    %7 = vector.multi_reduction <maximumf>, %6, %cst_5 [1] : vector<8x128xf32> to vector<8xf32>
    %8 = vector.shape_cast %7 : vector<8xf32> to vector<8x1xf32>
    %9 = vector.broadcast %8 : vector<8x1xf32> to vector<8x128xf32>
    %10 = arith.subf %6, %9 : vector<8x128xf32>
    %11 = math.exp %10 : vector<8x128xf32>
    %cst_6 = arith.constant dense<0.000000e+00> : vector<8xf32>
    %12 = vector.multi_reduction <add>, %11, %cst_6 [1] : vector<8x128xf32> to vector<8xf32>
    %13 = vector.shape_cast %12 : vector<8xf32> to vector<8x1xf32>
    %14 = math.log %13 : vector<8x1xf32>
    %15 = tpu.iota {dimensions = array<i32: 1>} : vector<8x128xi32>
    %16 = vector.broadcast %8 : vector<8x1xf32> to vector<8x128xf32>
    %17 = arith.cmpf oeq, %6, %16 : vector<8x128xf32>
    %c128_i32 = arith.constant 128 : i32
    %18 = vector.broadcast %c128_i32 : i32 to vector<8x128xi32>
    %19 = arith.select %17, %15, %18 : vector<8x128xi1>, vector<8x128xi32>
    %cst_7 = arith.constant dense<2147483647> : vector<8xi32>
    %20 = vector.multi_reduction <minsi>, %19, %cst_7 [1] : vector<8x128xi32> to vector<8xi32>
    %21 = vector.shape_cast %20 : vector<8xi32> to vector<8x1xi32>
    %c0_8 = arith.constant 0 : index
    %c0_9 = arith.constant 0 : index
    %22 = vector.load %arg4[%c0_8, %c0_9] : memref<8x1xi32, #tpu.memory_space<vmem>>, vector<8x1xi32>
    tpu.vector_store %arg4[%c0_8, %c0_9], %21 {strides = array<i32>} : memref<8x1xi32, #tpu.memory_space<vmem>>, vector<8x1xi32>,
    %cst_10 = arith.constant 0.000000e+00 : f32
    %23 = vector.broadcast %cst_10 : f32 to vector<8x1xf32>
    %24 = arith.subf %23, %14 : vector<8x1xf32>
    %c0_11 = arith.constant 0 : index
    %c0_12 = arith.constant 0 : index
    %25 = vector.load %arg5[%c0_11, %c0_12] : memref<8x1xf32, #tpu.memory_space<vmem>>, vector<8x1xf32>
    tpu.vector_store %arg5[%c0_11, %c0_12], %24 {strides = array<i32>} : memref<8x1xf32, #tpu.memory_space<vmem>>, vector<8x1xf32>,
    return
  }
  func.func @transform_0(%arg0: i32) -> (i32, i32) {
    %c0_i32 = arith.constant 0 : i32
    %c0_i32_0 = arith.constant 0 : i32
    return %arg0, %c0_i32 : i32, i32
  }
  func.func @transform_1(%arg0: i32) -> (i32, i32) {
    %c0_i32 = arith.constant 0 : i32
    %c0_i32_0 = arith.constant 0 : i32
    %c0_i32_1 = arith.constant 0 : i32
    return %c0_i32, %c0_i32_0 : i32, i32
  }
  func.func @transform_2(%arg0: i32) -> (i32, i32) {
    %c0_i32 = arith.constant 0 : i32
    %c0_i32_0 = arith.constant 0 : i32
    %c0_i32_1 = arith.constant 0 : i32
    return %c0_i32, %c0_i32_0 : i32, i32
  }
  func.func @transform_3(%arg0: i32) -> (i32, i32) {
    %c0_i32 = arith.constant 0 : i32
    %c0_i32_0 = arith.constant 0 : i32
    return %arg0, %c0_i32 : i32, i32
  }
  func.func @transform_4(%arg0: i32) -> (i32, i32) {
    %c0_i32 = arith.constant 0 : i32
    %c0_i32_0 = arith.constant 0 : i32
    return %arg0, %c0_i32 : i32, i32
  }
}

</mosaic_0001>

<llo_original>
// kernel: backward_policy_forward.1
$region0: #{backward_policy_forward.1}
  #allocation0 [shape = 'u32[]', space=smem, size = 0x4, offset = 0x4, fixed_abs, tag = 'smem constant byte address 0x4 - core index']
  #allocation1 [shape = 'u32[144,128]{1,0:T(1,128)}', space=vmem, size = 0x12000, scoped, tag = 'internal scratch']
  %s0 = inlined_call_operand.hbm [shape: f32[8,32], index: 0, kind: input, shape index: {}]
  %s1 = inlined_call_operand.hbm [shape: bf16[32,128], index: 1, kind: input, shape index: {}]
  %s2 = inlined_call_operand.vmem [shape: f32[1,128], index: 2, kind: input, shape index: {}]
  %s3 = inlined_call_operand.vmem [shape: s32[8,1], index: 3, kind: output, shape index: {0}]
  %s4 = inlined_call_operand.vmem [shape: f32[8,1], index: 4, kind: output, shape index: {1}]
  %5 = xla_tuple %s3, %s4
  %s6 = sld [smem:[#allocation0]]
  $region38: #{backward_policy_forward.1} parent=0
    _
  %s8 = ssub.s32 1, %s6
  %s9 = scalar_select 0, %s8, %s6
  $region1: #{backward_policy_forward.1} parent=0
    #allocation2 [shape = 'u8[4096]{0}', space=vmem, size = 0x1000, scoped, tag = 'input window, operand 0, single buffered']
    #allocation3 [shape = 's32[1]{0}', space=sflag, size = 0x4, scoped, tag = 'scoped memory for backward_policy_forward.1']
    #allocation4 [shape = 'u8[8192]{0}', space=vmem, size = 0x2000, scoped, tag = 'input window, operand 1, single buffered']
    #allocation5 [shape = 's32[1]{0}', space=sflag, size = 0x4, scoped, tag = 'scoped memory for backward_policy_forward.1']
    %10 = vsyncpa [#allocation3], 0
    %11 = vsyncpa [#allocation5], 0
    // Predicated region
    $region2: #{backward_policy_forward.1} parent=1 // pred_check
      _
    $region3: #{backward_policy_forward.1} parent=1 // pred_check_branch
      %13 = sbr.rel (0) target = $region5
    $region4: #{backward_policy_forward.1} parent=1 // pred_region
      %s15 = ssub.s32 128, 128
      %16 = vsyncadd [#allocation3], %s15
      %s18 = sshll.u32 [#allocation2], 4
      %s19 = int_to_ptr.vmem [resolvable:$true] %s18
      %21 = dma.hbm_to_vmem [thread:$0]  %s0, 128, %s19, [#allocation3]
    $region5: #{backward_policy_forward.1} parent=1 // pred_fallthru
      _
    // Predicated region
    $region6: #{backward_policy_forward.1} parent=1 // pred_check
      _
    $region7: #{backward_policy_forward.1} parent=1 // pred_check_branch
      %23 = sbr.rel (0) target = $region9
    $region8: #{backward_policy_forward.1} parent=1 // pred_region
      %s25 = ssub.s32 256, 256
      %26 = vsyncadd [#allocation5], %s25
      %s27 = sshll.u32 [#allocation4], 4
      %s28 = int_to_ptr.vmem [resolvable:$true] %s27
      %33 = dma.hbm_to_vmem [thread:$0]  %s1, 256, %s28, [#allocation5], 64, 64, 4
    $region9: #{backward_policy_forward.1} parent=1 // pred_fallthru
      _
    // Predicated region
    $region10: #{backward_policy_forward.1} parent=1 // pred_check
      _
    $region11: #{backward_policy_forward.1} parent=1 // pred_check_branch
      %35 = sbr.rel (0) target = $region13
    $region12: #{backward_policy_forward.1} parent=1 // pred_region
      _
    $region13: #{backward_policy_forward.1} parent=1 // pred_fallthru
      _
    // Predicated region
    $region14: #{backward_policy_forward.1} parent=1 // pred_check
      _
    $region15: #{backward_policy_forward.1} parent=1 // pred_check_branch
      %37 = sbr.rel (0) target = $region17
    $region16: #{backward_policy_forward.1} parent=1 // pred_region
      %38 = dma.done [#allocation3], 128
    $region17: #{backward_policy_forward.1} parent=1 // pred_fallthru
      _
    // Predicated region
    $region18: #{backward_policy_forward.1} parent=1 // pred_check
      _
    $region19: #{backward_policy_forward.1} parent=1 // pred_check_branch
      %40 = sbr.rel (0) target = $region21
    $region20: #{backward_policy_forward.1} parent=1 // pred_region
      %41 = dma.done [#allocation5], 256
    $region21: #{backward_policy_forward.1} parent=1 // pred_fallthru
      _
    %v43 = vld [vmem:[#allocation2] sm:$0xff]
    %v44 = vpack.c.bf16 %v43, %v43
    %v45 = vld [vmem:[#allocation4] sm:$0xf]
    %v46 = vld [vmem:[#allocation4 + $0x4] sm:$0xf]
    %v47 = vld [vmem:[#allocation4 + $0x8] sm:$0xf]
    %v48 = vld [vmem:[#allocation4 + $0xc] sm:$0xf]
    %v49 = vld [vmem:[%s2] sm:$0x1]
    %v51 = vlaneseq
    %v52 = vshrl.u32 %v51, 7
    %v53 = vsub.s32 0, %v52
    %v54 = vrot.slane %v49, %v53
    %v60 = vunpack.c.l.b16 %v45
    %v61 = vunpack.c.l.b16 %v46
    %v62 = vunpack.c.l.b16 %v47
    %v63 = vunpack.c.l.b16 %v48
    %v64 = vpack.c.b16 %v61, %v60
    %v65 = vpack.c.b16 %v63, %v62
    %vm68 = vcmask 261120
    %v70 = vsel %vm68, %v44, 0
    %72 = vmatprep.subr.bf16.mxu0 0
    %73 = vmatpush1.bf16.msra.mxu0 0
    %74 = vmatprep.subr.bf16.mxu0 0
    %75 = vmatpush1.bf16.msra.mxu0 0
    %76 = vmatprep.subr.bf16.mxu0 0
    %77 = vmatpush1.bf16.msra.mxu0 0
    %78 = vmatprep.subr.bf16.mxu0 0
    %79 = vmatpush1.bf16.msra.mxu0 0
    %80 = vmatprep.subr.bf16.mxu0 0
    %81 = vmatpush1.bf16.msra.mxu0 0
    %82 = vmatprep.subr.bf16.mxu0 0
    %83 = vmatpush1.bf16.msra.mxu0 0
    %84 = vmatprep.subr.bf16.mxu0 0
    %85 = vmatpush1.bf16.msra.mxu0 %v65
    %86 = vmatprep.subr.bf16.mxu0 0
    %87 = vmatpush1.bf16.msra.mxu0 %v64
    %88 = vmatprep.subr.bf16.mxu0 0
    %89 = vmatpush2.bf16.msra.mxu0 0
    %90 = vmatprep.subr.bf16.mxu0 0
    %91 = vmatpush2.bf16.msra.mxu0 0
    %92 = vmatprep.subr.bf16.mxu0 0
    %93 = vmatpush2.bf16.msra.mxu0 0
    %94 = vmatprep.subr.bf16.mxu0 0
    %95 = vmatpush2.bf16.msra.mxu0 0
    %96 = vmatprep.subr.bf16.mxu0 0
    %97 = vmatpush2.bf16.msra.mxu0 0
    %98 = vmatprep.subr.bf16.mxu0 0
    %99 = vmatpush2.bf16.msra.mxu0 0
    %100 = vmatprep.subr.bf16.mxu0 0
    %101 = vmatpush2.bf16.msra.mxu0 0
    %102 = vmatprep.subr.bf16.mxu0 0
    %103 = vmatpush2.bf16.msra.mxu0 0
    %104 = vmatprep.mubr.bf16.mxu0 0
    %105 = vmatmul.mubr.bf16.gmra.mxu0 %v70
    %v106 = vpop.f32.mrf.mxu0
    %v107 = vadd.f32 %v54, %v106
    %v108 = vpop.f32.mrf.mxu0
    %v109 = vpop.f32.mrf.mxu0
    %v110 = vpop.f32.mrf.mxu0
    %111 = vdwg.mxu0
    %112 = vmax.xlane.f32.xlu0 %v107
    %v113 = vpop.xlane.xlu0 %112
    %v114 = vsub.f32 %v107, %v113
    %v115 = vmul.f32 %v114, 1.442695
    %v116 = vpow.pop %v115
    %117 = vadd.xlane.f32.xlu0 %v116
    %v118 = vpop.xlane.xlu0 %117
    %v119 = vlog2.pop %v118
    %v120 = vmul.f32 %v119, 0.6931472
    %v121 = vlaneseq
    %v122 = vand.u32 %v121, 127
    %vm123 = vcmp.eq.f32.partialorder %v107, %v113
    %v124 = vsel %vm123, %v122, 128
    %v125 = vand.u32 %v124, 65535
    %v126 = vshra.s32 %v124, 16
    %v127 = vcvt.s32.f32 %v125
    %v128 = vcvt.s32.f32 %v126
    %129 = vmin.xlane.f32.xlu0 %v128
    %v130 = vpop.xlane.xlu0 %129
    %vm131 = vcmp.eq.f32.partialorder %v128, %v130
    %v132 = vsel %vm131, %v127, inf
    %133 = vmin.xlane.f32.xlu0 %v132
    %v134 = vpop.xlane.xlu0 %133
    %v135 = vcvt.f32.s32 %v134
    %v136 = vcvt.f32.s32 %v130
    %v137 = vshll.u32 %v136, 16
    %v138 = vadd.s32 %v137, %v135
    %vm139 = vcmask 7168
    %140 = vst.msk [vmem:[%s3] sm:$0xff] %vm139, %v138
    %v141 = vsub.f32 0.0, %v120
    %142 = vst.msk [vmem:[%s4] sm:$0xff] %vm139, %v141
    // Predicated region
    $region22: #{backward_policy_forward.1} parent=1 // pred_check
      _
    $region23: #{backward_policy_forward.1} parent=1 // pred_check_branch
      %144 = sbr.rel (0) target = $region25
    $region24: #{backward_policy_forward.1} parent=1 // pred_region
      _
    $region25: #{backward_policy_forward.1} parent=1 // pred_fallthru
      _
    // Predicated region
    $region26: #{backward_policy_forward.1} parent=1 // pred_check
      _
    $region27: #{backward_policy_forward.1} parent=1 // pred_check_branch
      %146 = sbr.rel (0) target = $region29
    $region28: #{backward_policy_forward.1} parent=1 // pred_region
      _
    $region29: #{backward_policy_forward.1} parent=1 // pred_fallthru
      _
    // Predicated region
    $region30: #{backward_policy_forward.1} parent=1 // pred_check
      _
    $region31: #{backward_policy_forward.1} parent=1 // pred_check_branch
      %148 = sbr.rel (0) target = $region33
    $region32: #{backward_policy_forward.1} parent=1 // pred_region
      _
    $region33: #{backward_policy_forward.1} parent=1 // pred_fallthru
      _
    // Predicated region
    $region34: #{backward_policy_forward.1} parent=1 // pred_check
      _
    $region35: #{backward_policy_forward.1} parent=1 // pred_check_branch
      %150 = sbr.rel (0) target = $region37
    $region36: #{backward_policy_forward.1} parent=1 // pred_region
      _
    $region37: #{backward_policy_forward.1} parent=1 // pred_fallthru
      _
    %151 = vsyncpa [#allocation3], 1
    %152 = vsyncpa [#allocation5], 1

</llo_original>
